<compile_context>
chip_gen: v5e
topology: v5e:2x2
jax: 0.10.0
libtpu: 0.0.40
codegen_flags: <defaults>
</compile_context>

<pallas_src>
import functools

import jax
import jax.numpy as jnp
from jax import lax
from jax.experimental import pallas as pl
from jax.experimental.pallas import tpu as pltpu


# ---------------------------------------------------------------- utilities

def _vmem_limit_bytes():
    """Generation-aware scoped-VMEM ceiling (3/4 of capacity, <= 96 MiB)."""
    cap = 128 * 1024 * 1024
    try:
        cap = int(pltpu.get_tpu_info().vmem_capacity_bytes)
    except Exception:
        pass
    return max(32 * 1024 * 1024, min(cap - cap // 4, 96 * 1024 * 1024))


def _default_num_partitions():
    """# of TensorCores per device (1 on v5e/v6e, 2 on v7x); safe fallback 1."""
    try:
        return max(1, min(8, int(getattr(jax.devices()[0], "num_cores", 1))))
    except Exception:
        return 1


def _pick_tm(n, c, itemsize):
    """Batch-tile rows: ~4 MiB logits block, multiple of 8, capped at 8192."""
    tm = (4 * 1024 * 1024) // max(1, c * itemsize)
    tm = min(max(tm, 8), 8192)
    if tm >= n:
        return n                       # single block == full dim, always legal
    tm -= tm % 8
    return max(tm, 8)


def _focal_pow(omp, gamma):
    """(1 - p) ** gamma.  Integer gamma -> VPU repeated multiplies (no EUP pow);
    clamp only when needed (odd integer / non-integer)."""
    g = float(gamma)
    if g == 0.0:
        return jnp.ones_like(omp)
    if g.is_integer() and 0 < int(g) <= 16:
        gi = int(g)
        if gi % 2 != 0:                 # tiny negative (1-p) only hurts odd powers
            omp = jnp.maximum(omp, 0.0)
        result, base = None, omp
        while gi:
            if gi & 1:
                result = base if result is None else result * base
            gi >>= 1
            if gi:
                base = base * base
        return result
    return jnp.power(jnp.maximum(omp, 0.0), g)


# -------------------------------------------------------------- kernel math

def _soft_fl_pos(logits_ref, targets_ref, alpha_ref, *, gamma, has_alpha, row_valid):
    """Soft targets: returns alpha * tgt * log_p * (1-p)^g, shape (TM, C).
    (True per-element fl is the NEGATIVE of this; the sign is folded into the
    accumulation / final store.)"""
    x = logits_ref[...].astype(jnp.float32)
    if row_valid is not None:
        x = jnp.where(row_valid, x, 0.0)            # keep padded rows finite
    m = jnp.max(x, axis=1, keepdims=True)
    shifted = x - m
    e = jnp.exp(shifted)                             # single full-width exp
    s = jnp.sum(e, axis=1, keepdims=True)
    p = e * (1.0 / s)
    log_p = shifted - jnp.log(s)

    tgt = targets_ref[...].astype(jnp.float32)
    if row_valid is not None:
        tgt = jnp.where(row_valid, tgt, 0.0)         # padded rows contribute 0

    w = tgt * log_p
    if has_alpha:
        w = w * alpha_ref[...].astype(jnp.float32)
    return w * _focal_pow(1.0 - p, gamma)


def _hard_loss_pos(logits_ref, ids_ref, alpha_ref, *, gamma, has_alpha, row_valid):
    """Hard int labels fast path: per-row alpha_t * log_p_t * (1-p_t)^g, (TM, 1).
    Only exp(x-m) + two masked lane-sums run at full (TM, C) width."""
    x = logits_ref[...].astype(jnp.float32)
    if row_valid is not None:
        x = jnp.where(row_valid, x, 0.0)
    tm, c = x.shape
    m = jnp.max(x, axis=1, keepdims=True)
    e = jnp.exp(x - m)
    s = jnp.sum(e, axis=1, keepdims=True)

    ids = ids_ref[...]                                          # (TM, 1) int32
    cls = lax.broadcasted_iota(jnp.int32, (tm, c), 1)
    hit = cls == ids                                            # one-hot mask
    xt = jnp.sum(jnp.where(hit, x, 0.0), axis=1, keepdims=True)  # x[r, t_r]

    lp = xt - m - jnp.log(s)                                    # log p_t  (TM,1)
    pt = jnp.exp(lp)                                            # p_t      (TM,1)
    loss = lp * _focal_pow(1.0 - pt, gamma)
    if has_alpha:
        a_t = jnp.sum(jnp.where(hit, alpha_ref[...].astype(jnp.float32), 0.0),
                      axis=1, keepdims=True)
        loss = loss * a_t
    if row_valid is not None:
        loss = jnp.where(row_valid, loss, 0.0)
    return loss


# ------------------------------------------------------------------ kernels

def _accum_kernel(alpha_ref, logits_ref, tgt_ref, out_ref, *,
                  gamma, has_alpha, hard_labels, tiles_per_part, tm, n,
                  need_row_mask):
    """'mean'/'sum': accumulate per-tile partial sums into a resident block."""
    @pl.when(pl.program_id(1) == 0)
    def _init():
        out_ref[...] = jnp.zeros_like(out_ref)

    row_valid = None
    if need_row_mask:
        tile_idx = pl.program_id(0) * tiles_per_part + pl.program_id(1)
        rows = lax.broadcasted_iota(jnp.int32, (tm, 1), 0)
        row_valid = (tile_idx * tm + rows) < n

    if hard_labels:
        loss_pos = _hard_loss_pos(logits_ref, tgt_ref, alpha_ref, gamma=gamma,
                                  has_alpha=has_alpha, row_valid=row_valid)
        out_ref[...] -= jnp.sum(loss_pos, axis=0, keepdims=True)[None]   # (1,1,1)
    else:
        fl_pos = _soft_fl_pos(logits_ref, tgt_ref, alpha_ref, gamma=gamma,
                              has_alpha=has_alpha, row_valid=row_valid)
        out_ref[...] -= jnp.sum(fl_pos, axis=0, keepdims=True)[None]     # (1,1,C)


def _rowsum_kernel(alpha_ref, logits_ref, tgt_ref, out_ref, *,
                   gamma, has_alpha, hard_labels, tm, n, need_row_mask):
    """reduction='none': per-sample loss for this tile, block (1, TM, 1)."""
    row_valid = None
    if need_row_mask:
        rows = lax.broadcasted_iota(jnp.int32, (tm, 1), 0)
        row_valid = (pl.program_id(0) * tm + rows) < n

    if hard_labels:
        loss_pos = _hard_loss_pos(logits_ref, tgt_ref, alpha_ref, gamma=gamma,
                                  has_alpha=has_alpha, row_valid=row_valid)
    else:
        fl_pos = _soft_fl_pos(logits_ref, tgt_ref, alpha_ref, gamma=gamma,
                              has_alpha=has_alpha, row_valid=row_valid)
        loss_pos = jnp.sum(fl_pos, axis=1, keepdims=True)
    out_ref[...] = (-loss_pos)[None]


# ------------------------------------------------------------------ wrapper

def soft_target_focal_loss(logits, targets, alpha=None, *, gamma=2.0,
                           reduction="mean", tm=None, num_partitions=None,
                           buffer_count=2):
    """Pallas TPU implementation of SoftTargetFocalLoss.forward.

    logits:  (N, C) float (f32 / bf16)
    targets: (N,) int class ids  OR  (N, C) soft targets
    alpha:   (C,) per-class weights, or None
    """
    reduction = reduction or "mean"
    n, c = logits.shape
    hard_labels = (targets.ndim == 1)
    has_alpha = alpha is not None

    alpha_row = (jnp.asarray(alpha, jnp.float32).reshape(1, c) if has_alpha
                 else jnp.ones((1, c), jnp.float32))            # unused if no alpha

    if hard_labels:
        # (N, 1) int32 ids; one-hot is never materialized in HBM.  The (tm,1)
        # block pads to (tm,128) in VMEM (<= ~8 MiB double-buffered at tm=8192),
        # which is accounted for in the tile budget below.
        tgt_arr = targets.astype(jnp.int32).reshape(n, 1)
    else:
        tgt_arr = targets

    if tm is None:
        tm = _pick_tm(n, c, jnp.dtype(logits.dtype).itemsize)
    else:
        tm = int(tm)
        tm = min(tm, 8192)
        if tm >= n:
            tm = n
        else:
            tm -= tm % 8
            tm = max(tm, 8)

    n_tiles = pl.cdiv(n, tm)
    vmem_limit = _vmem_limit_bytes()

    def big_spec(shape, idx_map):
        if buffer_count == 2:
            return pl.BlockSpec(shape, idx_map)
        return pl.BlockSpec(shape, idx_map,
                            pipeline_mode=pl.Buffered(int(buffer_count)))

    if reduction in ("mean", "sum"):
        p_parts = (num_partitions if num_partitions is not None
                   else _default_num_partitions())
        p_parts = max(1, min(int(p_parts), n_tiles))
        tiles_per_part = pl.cdiv(n_tiles, p_parts)
        overshoot = p_parts * tiles_per_part > n_tiles
        need_row_mask = (p_parts * tiles_per_part * tm) > n

        def data_idx(p, i):
            t = p * tiles_per_part + i
            if overshoot:                        # clamp: never DMA a fully-OOB block
                t = jnp.minimum(t, n_tiles - 1)  # (re-read tile is fully row-masked)
            return (t, 0)

        out_w = 1 if hard_labels else c
        tgt_spec = (pl.BlockSpec((tm, 1), data_idx) if hard_labels
                    else big_spec((tm, c), data_idx))

        kernel = functools.partial(
            _accum_kernel, gamma=float(gamma), has_alpha=has_alpha,
            hard_labels=hard_labels, tiles_per_part=tiles_per_part,
            tm=tm, n=n, need_row_mask=need_row_mask)

        out = pl.pallas_call(
            kernel,
            out_shape=jax.ShapeDtypeStruct((p_parts, 1, out_w), jnp.float32),
            grid_spec=pltpu.PrefetchScalarGridSpec(
                num_scalar_prefetch=0,
                grid=(p_parts, tiles_per_part),
                in_specs=[
                    pl.BlockSpec((1, c), lambda p, i: (0, 0)),   # alpha (resident)
                    big_spec((tm, c), data_idx),                 # logits
                    tgt_spec,                                    # targets / ids
                ],
                out_specs=pl.BlockSpec((1, 1, out_w), lambda p, i: (p, 0, 0)),
            ),
            compiler_params=pltpu.CompilerParams(
                dimension_semantics=("parallel", "arbitrary"),
                vmem_limit_bytes=vmem_limit),
        )(alpha_row, logits, tgt_arr)

        total = jnp.sum(out)                     # tiny reduce over (P, 1, W) in XLA
        return total / jnp.float32(n) if reduction == "mean" else total

    elif reduction == "none":
        need_row_mask = n_tiles * tm > n

        def data_idx(i):
            return (i, 0)

        tgt_spec = (pl.BlockSpec((tm, 1), data_idx) if hard_labels
                    else big_spec((tm, c), data_idx))

        kernel = functools.partial(
            _rowsum_kernel, gamma=float(gamma), has_alpha=has_alpha,
            hard_labels=hard_labels, tm=tm, n=n, need_row_mask=need_row_mask)

        # TODO(synk): a lane-dense (1, tm) per-tile output (in-kernel transpose of
        # the (tm,1) row sums) would shave a few % of store cost; kept sublane-major
        # for lowering robustness across Mosaic versions.
        out = pl.pallas_call(
            kernel,
            out_shape=jax.ShapeDtypeStruct((n_tiles, tm, 1), jnp.float32),
            grid_spec=pltpu.PrefetchScalarGridSpec(
                num_scalar_prefetch=0,
                grid=(n_tiles,),
                in_specs=[
                    pl.BlockSpec((1, c), lambda i: (0, 0)),
                    big_spec((tm, c), data_idx),
                    tgt_spec,
                ],
                out_specs=pl.BlockSpec((1, tm, 1), lambda i: (i, 0, 0)),
            ),
            compiler_params=pltpu.CompilerParams(
                dimension_semantics=("parallel",),
                vmem_limit_bytes=vmem_limit),
        )(alpha_row, logits, tgt_arr)
        return out.reshape(n_tiles * tm)[:n]

    else:
        raise ValueError(f"unsupported reduction: {reduction!r}")


# ---------------------------------------------------------------- reference

def _reference(logits, targets, alpha, gamma=2.0, reduction="mean"):
    c = logits.shape[1]
    if targets.ndim == 1:
        targets = jax.nn.one_hot(targets, c, dtype=jnp.float32)
    log_p = jax.nn.log_softmax(logits.astype(jnp.float32), axis=1)
    p = jnp.exp(log_p)
    a = (jnp.ones((1, c), jnp.float32) if alpha is None
         else jnp.asarray(alpha, jnp.float32).reshape(1, c))
    fl = a * (-targets * log_p) * (1.0 - p) ** gamma
    per = fl.sum(axis=1)
    if reduction == "mean":
        return per.mean()
    if reduction == "sum":
        return per.sum()
    return per


if __name__ == "__main__":
    key = jax.random.PRNGKey(0)
    k1, k2, k3, k4 = jax.random.split(key, 4)

    N, C = 16, 16
    logits = jax.random.normal(k1, (N, C), dtype=jnp.float32)
    soft_t = jax.nn.softmax(jax.random.normal(k2, (N, C), dtype=jnp.float32), axis=1)
    hard_t = jax.random.randint(k3, (N,), 0, C)
    alpha = jnp.linspace(0.5, 1.5, C, dtype=jnp.float32)

    # 1) soft targets, 'mean'
    out = jax.block_until_ready(
        soft_target_focal_loss(logits, soft_t, alpha, gamma=2.0, reduction="mean"))
    ref = _reference(logits, soft_t, alpha, 2.0, "mean")
    assert jnp.allclose(out, ref, rtol=1e-5, atol=1e-5), (out, ref)

    # 2) hard int labels (fast path), 'sum'
    out = jax.block_until_ready(
        soft_target_focal_loss(logits, hard_t, alpha, gamma=2.0, reduction="sum"))
    ref = _reference(logits, hard_t, alpha, 2.0, "sum")
    assert jnp.allclose(out, ref, rtol=1e-5, atol=1e-5), (out, ref)

    # 3) soft targets, 'none'
    out = jax.block_until_ready(
        soft_target_focal_loss(logits, soft_t, alpha, gamma=2.0, reduction="none"))
    ref = _reference(logits, soft_t, alpha, 2.0, "none")
    assert jnp.allclose(out, ref, rtol=1e-5, atol=1e-5)

    # 4) partial last tile (row-mask path), hard labels, no alpha, 'mean'
    N2, C2 = 20, 12
    logits2 = jax.random.normal(k4, (N2, C2), dtype=jnp.float32)
    hard_t2 = jax.random.randint(k2, (N2,), 0, C2)
    out = jax.block_until_ready(
        soft_target_focal_loss(logits2, hard_t2, None, gamma=2.0,
                               reduction="mean", tm=8))
    ref = _reference(logits2, hard_t2, None, 2.0, "mean")
    assert jnp.allclose(out, ref, rtol=1e-5, atol=1e-5), (out, ref)

    # 5) partial last tile, soft targets, 'none'
    soft_t2 = jax.nn.softmax(jax.random.normal(k3, (N2, C2), dtype=jnp.float32), axis=1)
    out = jax.block_until_ready(
        soft_target_focal_loss(logits2, soft_t2, alpha[:C2], gamma=2.0,
                               reduction="none", tm=8))
    ref = _reference(logits2, soft_t2, alpha[:C2], 2.0, "none")
    assert jnp.allclose(out, ref, rtol=1e-5, atol=1e-5)

    print("KERNEL_OK")
</pallas_src>

<mosaic_0001>
module attributes {stable_mosaic.version = 11 : i64} {
  func.func @_accum_kernel(%arg0: i32, %arg1: i32, %arg2: memref<1x16xf32, #tpu.memory_space<vmem>>, %arg3: memref<16x16xf32, #tpu.memory_space<vmem>>, %arg4: memref<16x16xf32, #tpu.memory_space<vmem>>, %arg5: memref<1x1x16xf32, #tpu.memory_space<vmem>>) attributes {dimension_semantics = [#tpu.dimension_semantics<parallel>, #tpu.dimension_semantics<arbitrary>], iteration_bounds = array<i64: 1, 1>, scalar_prefetch = 0 : i64, scratch_operands = 0 : i64, tpu.core_type = #tpu.core_type<tc>, window_params = [{pipeline_mode = #tpu.pipeline_mode<synchronous>, transform_indices = @transform_0, window_bounds = array<i64: 1, 16>}, {transform_indices = @transform_1, window_bounds = array<i64: 16, 16>}, {transform_indices = @transform_2, window_bounds = array<i64: 16, 16>}, {transform_indices = @transform_3, window_bounds = array<i64: 1, 1, 16>}]} {
    %c0_i32 = arith.constant 0 : i32
    %0 = arith.cmpi eq, %arg1, %c0_i32 : i32
    %1 = arith.extui %0 : i1 to i32
    %c0_i32_0 = arith.constant 0 : i32
    %2 = arith.cmpi ne, %1, %c0_i32_0 : i32
    scf.if %2 {
      %cst_16 = arith.constant 0.000000e+00 : f32
      %33 = vector.broadcast %cst_16 : f32 to vector<1x1x16xf32>
      %c0_17 = arith.constant 0 : index
      %c0_18 = arith.constant 0 : index
      %c0_19 = arith.constant 0 : index
      %34 = vector.load %arg5[%c0_17, %c0_18, %c0_19] : memref<1x1x16xf32, #tpu.memory_space<vmem>>, vector<1x1x16xf32>
      tpu.vector_store %arg5[%c0_17, %c0_18, %c0_19], %33 {strides = array<i32>} : memref<1x1x16xf32, #tpu.memory_space<vmem>>, vector<1x1x16xf32>,
    } else {
    }
    %c0 = arith.constant 0 : index
    %c0_1 = arith.constant 0 : index
    %3 = vector.load %arg3[%c0, %c0_1] : memref<16x16xf32, #tpu.memory_space<vmem>>, vector<16x16xf32>
    %cst = arith.constant dense<0xFF800000> : vector<16xf32>
    %4 = vector.multi_reduction <maximumf>, %3, %cst [1] : vector<16x16xf32> to vector<16xf32>
    %5 = vector.shape_cast %4 : vector<16xf32> to vector<16x1xf32>
    %6 = vector.broadcast %5 : vector<16x1xf32> to vector<16x16xf32>
    %7 = arith.subf %3, %6 : vector<16x16xf32>
    %8 = math.exp %7 : vector<16x16xf32>
    %cst_2 = arith.constant dense<0.000000e+00> : vector<16xf32>
    %9 = vector.multi_reduction <add>, %8, %cst_2 [1] : vector<16x16xf32> to vector<16xf32>
    %10 = vector.shape_cast %9 : vector<16xf32> to vector<16x1xf32>
    %cst_3 = arith.constant 1.000000e+00 : f32
    %11 = vector.broadcast %cst_3 : f32 to vector<16x1xf32>
    %12 = arith.divf %11, %10 : vector<16x1xf32>
    %13 = vector.broadcast %12 : vector<16x1xf32> to vector<16x16xf32>
    %14 = arith.mulf %8, %13 : vector<16x16xf32>
    %15 = math.log %10 : vector<16x1xf32>
    %16 = vector.broadcast %15 : vector<16x1xf32> to vector<16x16xf32>
    %17 = arith.subf %7, %16 : vector<16x16xf32>
    %c0_4 = arith.constant 0 : index
    %c0_5 = arith.constant 0 : index
    %18 = vector.load %arg4[%c0_4, %c0_5] : memref<16x16xf32, #tpu.memory_space<vmem>>, vector<16x16xf32>
    %19 = arith.mulf %18, %17 : vector<16x16xf32>
    %c0_6 = arith.constant 0 : index
    %c0_7 = arith.constant 0 : index
    %20 = vector.load %arg2[%c0_6, %c0_7] : memref<1x16xf32, #tpu.memory_space<vmem>>, vector<1x16xf32>
    %21 = vector.broadcast %20 : vector<1x16xf32> to vector<16x16xf32>
    %22 = arith.mulf %19, %21 : vector<16x16xf32>
    %cst_8 = arith.constant 1.000000e+00 : f32
    %23 = vector.broadcast %cst_8 : f32 to vector<16x16xf32>
    %24 = arith.subf %23, %14 : vector<16x16xf32>
    %25 = arith.mulf %24, %24 : vector<16x16xf32>
    %26 = arith.mulf %22, %25 : vector<16x16xf32>
    %c0_9 = arith.constant 0 : index
    %c0_10 = arith.constant 0 : index
    %c0_11 = arith.constant 0 : index
    %27 = vector.load %arg5[%c0_9, %c0_10, %c0_11] : memref<1x1x16xf32, #tpu.memory_space<vmem>>, vector<1x1x16xf32>
    %cst_12 = arith.constant dense<0.000000e+00> : vector<16xf32>
    %28 = vector.multi_reduction <add>, %26, %cst_12 [0] : vector<16x16xf32> to vector<16xf32>
    %29 = vector.shape_cast %28 : vector<16xf32> to vector<1x16xf32>
    %30 = vector.shape_cast %29 : vector<1x16xf32> to vector<1x1x16xf32>
    %31 = arith.subf %27, %30 : vector<1x1x16xf32>
    %c0_13 = arith.constant 0 : index
    %c0_14 = arith.constant 0 : index
    %c0_15 = arith.constant 0 : index
    %32 = vector.load %arg5[%c0_13, %c0_14, %c0_15] : memref<1x1x16xf32, #tpu.memory_space<vmem>>, vector<1x1x16xf32>
    tpu.vector_store %arg5[%c0_13, %c0_14, %c0_15], %31 {strides = array<i32>} : memref<1x1x16xf32, #tpu.memory_space<vmem>>, vector<1x1x16xf32>,
    return
  }
  func.func @transform_0(%arg0: i32, %arg1: i32) -> (i32, i32) {
    %c0_i32 = arith.constant 0 : i32
    %c0_i32_0 = arith.constant 0 : i32
    %c0_i32_1 = arith.constant 0 : i32
    return %c0_i32, %c0_i32_0 : i32, i32
  }
  func.func @transform_1(%arg0: i32, %arg1: i32) -> (i32, i32) {
    %c1_i32 = arith.constant 1 : i32
    %0 = arith.muli %arg0, %c1_i32 : i32
    %1 = arith.addi %0, %arg1 : i32
    %c0_i32 = arith.constant 0 : i32
    %c0_i32_0 = arith.constant 0 : i32
    return %1, %c0_i32 : i32, i32
  }
  func.func @transform_2(%arg0: i32, %arg1: i32) -> (i32, i32) {
    %c1_i32 = arith.constant 1 : i32
    %0 = arith.muli %arg0, %c1_i32 : i32
    %1 = arith.addi %0, %arg1 : i32
    %c0_i32 = arith.constant 0 : i32
    %c0_i32_0 = arith.constant 0 : i32
    return %1, %c0_i32 : i32, i32
  }
  func.func @transform_3(%arg0: i32, %arg1: i32) -> (i32, i32, i32) {
    %c0_i32 = arith.constant 0 : i32
    %c0_i32_0 = arith.constant 0 : i32
    %c0_i32_1 = arith.constant 0 : i32
    return %arg0, %c0_i32, %c0_i32_0 : i32, i32, i32
  }
}

</mosaic_0001>

<llo_original>
// kernel: tpu_custom_call.1
$region0: #{tpu_custom_call.1}
  #allocation0 [shape = 'u32[]', space=smem, size = 0x4, offset = 0x4, fixed_abs, tag = 'smem constant byte address 0x4 - core index']
  #allocation1 [shape = 'u32[72,128]{1,0:T(1,128)}', space=vmem, size = 0x9000, scoped, tag = 'internal scratch']
  %s0 = inlined_call_operand.hbm [shape: f32[1,16], index: 0, kind: input, shape index: {}]
  %s1 = inlined_call_operand.hbm [shape: f32[16,16], index: 1, kind: input, shape index: {}]
  %s2 = inlined_call_operand.hbm [shape: f32[16,16], index: 2, kind: input, shape index: {}]
  %s3 = inlined_call_operand.hbm [shape: f32[1,1,16], index: 3, kind: output, shape index: {}]
  %s4 = sld [smem:[#allocation0]]
  $region38: #{tpu_custom_call.1} parent=0
    _
  %s6 = ssub.s32 1, %s4
  %s7 = scalar_select 0, %s6, %s4
  $region1: #{tpu_custom_call.1} parent=0
    #allocation2 [shape = 'u8[512]{0}', space=vmem, size = 0x400, scoped, tag = 'input window, operand 0, single buffered']
    #allocation3 [shape = 's32[1]{0}', space=sflag, size = 0x4, scoped, tag = 'scoped memory for tpu_custom_call.1']
    #allocation4 [shape = 's32[1]{0}', space=sflag, size = 0x4, scoped, tag = 'scoped memory for tpu_custom_call.1']
    #allocation5 [shape = 'u8[8192]{0}', space=vmem, size = 0x2000, scoped, tag = 'input window, operand 1, single buffered']
    #allocation6 [shape = 's32[1]{0}', space=sflag, size = 0x4, scoped, tag = 'scoped memory for tpu_custom_call.1']
    #allocation7 [shape = 'u8[8192]{0}', space=vmem, size = 0x2000, scoped, tag = 'input window, operand 2, single buffered']
    #allocation8 [shape = 'u8[512]{0}', space=vmem, size = 0x400, scoped, tag = 'output window, operand 0, single buffered']
    %8 = vsyncpa [#allocation3], 0
    %9 = vsyncpa [#allocation6], 0
    %10 = vsyncpa [#allocation4], 0
    // Predicated region
    $region2: #{tpu_custom_call.1} parent=1 // pred_check
      _
    $region3: #{tpu_custom_call.1} parent=1 // pred_check_branch
      %12 = sbr.rel (0) target = $region5
    $region4: #{tpu_custom_call.1} parent=1 // pred_region
      %14 = vsyncadd [#allocation3], 0
      %s16 = sshll.u32 %s0, 4
      %s17 = int_to_ptr.hbm [resolvable:$true] %s16
      %s18 = sshll.u32 [#allocation2], 4
      %s19 = int_to_ptr.vmem [resolvable:$true] %s18
      %21 = dma.hbm_to_vmem [thread:$0]  %s17, 16, %s19, [#allocation3]
    $region5: #{tpu_custom_call.1} parent=1 // pred_fallthru
      _
    // Predicated region
    $region6: #{tpu_custom_call.1} parent=1 // pred_check
      _
    $region7: #{tpu_custom_call.1} parent=1 // pred_check_branch
      %23 = sbr.rel (0) target = $region9
    $region8: #{tpu_custom_call.1} parent=1 // pred_region
      %s24 = sadd.s32 0, 0
      %s25 = smul.u32 2, %s24
      %27 = vsyncadd [#allocation6], 0
      %s28 = smul.addr %s25, 8
      %s29 = scalar_lea.hbm %s1, %s28
      %s30 = sshll.u32 %s29, 4
      %s31 = int_to_ptr.hbm [resolvable:$true] %s30
      %s32 = sshll.u32 [#allocation5], 4
      %s33 = int_to_ptr.vmem [resolvable:$true] %s32
      %38 = dma.hbm_to_vmem [thread:$0]  %s31, 256, %s33, [#allocation6], 128, 128, 8
    $region9: #{tpu_custom_call.1} parent=1 // pred_fallthru
      _
    // Predicated region
    $region10: #{tpu_custom_call.1} parent=1 // pred_check
      _
    $region11: #{tpu_custom_call.1} parent=1 // pred_check_branch
      %40 = sbr.rel (0) target = $region13
    $region12: #{tpu_custom_call.1} parent=1 // pred_region
      %s41 = sadd.s32 0, 0
      %s42 = smul.u32 2, %s41
      %44 = vsyncadd [#allocation6], 0
      %s45 = smul.addr %s42, 8
      %s46 = scalar_lea.hbm %s2, %s45
      %s47 = sshll.u32 %s46, 4
      %s48 = int_to_ptr.hbm [resolvable:$true] %s47
      %s49 = sshll.u32 [#allocation7], 4
      %s50 = int_to_ptr.vmem [resolvable:$true] %s49
      %55 = dma.hbm_to_vmem [thread:$0]  %s48, 256, %s50, [#allocation6], 128, 128, 8
    $region13: #{tpu_custom_call.1} parent=1 // pred_fallthru
      _
    // Predicated region
    $region14: #{tpu_custom_call.1} parent=1 // pred_check
      _
    $region15: #{tpu_custom_call.1} parent=1 // pred_check_branch
      %57 = sbr.rel (0) target = $region17
    $region16: #{tpu_custom_call.1} parent=1 // pred_region
      %59 = dma.done [#allocation3], 16
    $region17: #{tpu_custom_call.1} parent=1 // pred_fallthru
      _
    // Predicated region
    $region18: #{tpu_custom_call.1} parent=1 // pred_check
      _
    $region19: #{tpu_custom_call.1} parent=1 // pred_check_branch
      %61 = sbr.rel (0) target = $region21
    $region20: #{tpu_custom_call.1} parent=1 // pred_region
      %63 = dma.done [#allocation6], 256
    $region21: #{tpu_custom_call.1} parent=1 // pred_fallthru
      _
    // Predicated region
    $region22: #{tpu_custom_call.1} parent=1 // pred_check
      _
    $region23: #{tpu_custom_call.1} parent=1 // pred_check_branch
      %65 = sbr.rel (0) target = $region25
    $region24: #{tpu_custom_call.1} parent=1 // pred_region
      %67 = dma.done [#allocation6], 256
    $region25: #{tpu_custom_call.1} parent=1 // pred_fallthru
      _
    %s68 = sadd.s32 0, 0
    %s69 = smul.u32 2, %s68
    %s70 = sadd.s32 0, 0
    %s71 = smul.u32 2, %s70
    %p72 = scmp.eq.s32.totalorder 0, 0
    // Predicated region
    $region26: #{tpu_custom_call.1} parent=1 // pred_check
      %p73 = pneg %p72
    $region27: #{tpu_custom_call.1} parent=1 // pred_check_branch
      %75 = sbr.rel (%p73) target = $region29
    $region28: #{tpu_custom_call.1} parent=1 // pred_region
      %vm76 = vcmask 122880
      %77 = vst.msk [vmem:[#allocation8] sm:$0x1] %vm76, 0.0
    $region29: #{tpu_custom_call.1} parent=1 // pred_fallthru
      _
    %v78 = vld [vmem:[#allocation5] sm:$0xff]
    %v79 = vld [vmem:[#allocation5 + $0x8] sm:$0xff]
    %vm80 = vcmask 130048
    %v81 = vsel %vm80, %v78, -inf
    %82 = vmax.xlane.f32.xlu0 %v81
    %v83 = vpop.xlane.xlu0 %82
    %v84 = vsel %vm80, %v79, -inf
    %85 = vmax.xlane.f32.xlu0 %v84
    %v86 = vpop.xlane.xlu0 %85
    %v87 = vsub.f32 %v78, %v83
    %v88 = vsub.f32 %v79, %v86
    %v89 = vmul.f32 %v87, 1.442695
    %v90 = vpow.pop %v89
    %v91 = vmul.f32 %v88, 1.442695
    %v92 = vpow.pop %v91
    %v93 = vsel %vm80, %v90, 0.0
    %94 = vadd.xlane.f32.xlu0 %v93
    %v95 = vpop.xlane.xlu0 %94
    %v96 = vsel %vm80, %v92, 0.0
    %97 = vadd.xlane.f32.xlu0 %v96
    %v98 = vpop.xlane.xlu0 %97
    %v99 = vrcp.pop %v95
    %v100 = vmul.f32 %v95, %v99
    %v101 = vsub.f32 1.0, %v100
    %v102 = vmul.f32 %v99, %v101
    %v103 = vadd.f32 %v99, %v102
    %vm104 = vweird.f32 %v95
    %vm105 = vweird.f32 %v99
    %vm106 = vmor %vm104, %vm105
    %v107 = vsel %vm106, %v99, %v103
    %v108 = vand.u32 2147483647, %v95
    %vm109 = vcmp.eq.f32.partialorder %v108, 8.507059e+37
    %v110 = vand.u32 %v95, 2147483648
    %v111 = vor.u32 1.1754944e-38, %v110
    %v112 = vsel %vm109, %v111, %v107
    %v113 = vmul.f32 1.0, %v112
    %v114 = vrcp.pop %v98
    %v115 = vmul.f32 %v98, %v114
    %v116 = vsub.f32 1.0, %v115
    %v117 = vmul.f32 %v114, %v116
    %v118 = vadd.f32 %v114, %v117
    %vm119 = vweird.f32 %v98
    %vm120 = vweird.f32 %v114
    %vm121 = vmor %vm119, %vm120
    %v122 = vsel %vm121, %v114, %v118
    %v123 = vand.u32 2147483647, %v98
    %vm124 = vcmp.eq.f32.partialorder %v123, 8.507059e+37
    %v125 = vand.u32 %v98, 2147483648
    %v126 = vor.u32 1.1754944e-38, %v125
    %v127 = vsel %vm124, %v126, %v122
    %v128 = vmul.f32 1.0, %v127
    %v129 = vmul.f32 %v90, %v113
    %v130 = vmul.f32 %v92, %v128
    %v131 = vlog2.pop %v95
    %v132 = vmul.f32 %v131, 0.6931472
    %v133 = vlog2.pop %v98
    %v134 = vmul.f32 %v133, 0.6931472
    %v135 = vsub.f32 %v87, %v132
    %v136 = vsub.f32 %v88, %v134
    %v137 = vld [vmem:[#allocation7] sm:$0xff]
    %v138 = vld [vmem:[#allocation7 + $0x8] sm:$0xff]
    %v139 = vmul.f32 %v137, %v135
    %v140 = vmul.f32 %v138, %v136
    %v141 = vld [vmem:[#allocation2] sm:$0x1]
    %v143 = vperm.slane %v141, 0
    %v145 = vmul.f32 %v139, %v143
    %v146 = vmul.f32 %v140, %v143
    %v147 = vsub.f32 1.0, %v129
    %v148 = vsub.f32 1.0, %v130
    %v149 = vmul.f32 %v147, %v147
    %v150 = vmul.f32 %v148, %v148
    %v151 = vmul.f32 %v145, %v149
    %v152 = vmul.f32 %v146, %v150
    %v153 = vld [vmem:[#allocation8] sm:$0x1]
    %v154 = vsel %vm80, %v151, 0.0
    %v155 = vsel %vm80, %v152, 0.0
    %v156 = vadd.f32 %v154, %v155
    %v157 = vrot.slane %v156, 4
    %v158 = vadd.f32 %v156, %v157
    %v159 = vrot.slane %v158, 2
    %v160 = vadd.f32 %v158, %v159
    %v161 = vrot.slane %v160, 1
    %v162 = vadd.f32 %v160, %v161
    %v163 = vsub.f32 %v153, %v162
    %vm164 = vcmask 122880
    %165 = vst.msk [vmem:[#allocation8] sm:$0x1] %vm164, %v163
    // Predicated region
    $region30: #{tpu_custom_call.1} parent=1 // pred_check
      _
    $region31: #{tpu_custom_call.1} parent=1 // pred_check_branch
      %167 = sbr.rel (0) target = $region33
    $region32: #{tpu_custom_call.1} parent=1 // pred_region
      %169 = vsyncadd [#allocation4], 0
      %s171 = sshll.u32 [#allocation8], 4
      %s172 = int_to_ptr.vmem [resolvable:$true] %s171
      %s173 = sshll.u32 %s3, 4
      %s174 = int_to_ptr.hbm [resolvable:$true] %s173
      %176 = dma.vmem_to_hbm [thread:$0]  %s172, 16, %s174, [#allocation4]
    $region33: #{tpu_custom_call.1} parent=1 // pred_fallthru
      _
    // Predicated region
    $region34: #{tpu_custom_call.1} parent=1 // pred_check
      _
    $region35: #{tpu_custom_call.1} parent=1 // pred_check_branch
      %178 = sbr.rel (0) target = $region37
    $region36: #{tpu_custom_call.1} parent=1 // pred_region
      %180 = dma.done [#allocation4], 16
    $region37: #{tpu_custom_call.1} parent=1 // pred_fallthru
      _
    %181 = vsyncpa [#allocation3], 1
    %182 = vsyncpa [#allocation6], 1
    %183 = vsyncpa [#allocation4], 1

</llo_original>
